<compile_context>
chip_gen: v5e
topology: v5e:2x2
jax: 0.10.0
libtpu: 0.0.40
codegen_flags: <defaults>
</compile_context>

<pallas_src>
import math

import jax
import jax.numpy as jnp
from jax.experimental import pallas as pl
from jax.experimental.pallas import tpu as pltpu


def _round_up(x, m):
    return ((x + m - 1) // m) * m


def _gaussian_logprob_kernel(const_ref, mean_ref, inv_std_ref, z_ref, out_ref):
    # const_ref:   (1,)  f32 in SMEM  -> -sum(log std) - 0.5*D*log(2*pi)
    # mean_ref:    (1, D) f32 in VMEM
    # inv_std_ref: (1, D) f32 in VMEM (precomputed 1/std)
    # z_ref:       (TB, D) latents (f32 or bf16; upcast here)
    # out_ref:     (TB, 1) per-sample log prob
    z = z_ref[...].astype(jnp.float32)
    diff = (z - mean_ref[...]) * inv_std_ref[...]
    row = jnp.sum(-0.5 * (diff * diff), axis=-1, keepdims=True)  # [TB, 1]
    out_ref[...] = row + const_ref[0]


def gaussian_prior_log_prob(z, mean, std, *, block_rows=1024):
    """log_prob of z under Independent(Normal(mean, std), 1).

    z:    [B, D] float32 (or bf16)
    mean: [D]    float32
    std:  [D]    float32
    returns [B] float32
    """
    B, D = z.shape

    mean2 = mean.reshape(1, D).astype(jnp.float32)
    inv_std2 = (1.0 / std).reshape(1, D).astype(jnp.float32)
    # Per-row additive constant, hoisted out of the kernel entirely.
    const = (
        -jnp.sum(jnp.log(std.astype(jnp.float32)))
        - 0.5 * D * math.log(2.0 * math.pi)
    ).reshape(1).astype(jnp.float32)

    # Batch-tile size: as large as possible (per-grid-step overhead ~0.35us)
    # while keeping one z buffer under ~4 MiB so the double-buffered pipeline
    # stays well inside scoped VMEM on every generation (incl. v7x's 64 MiB).
    rows_by_vmem = max(8, (4 * 1024 * 1024) // (D * 4))
    tb = min(block_rows, rows_by_vmem, _round_up(B, 8))
    tb = max(8, (tb // 8) * 8)
    grid = (pl.cdiv(B, tb),)

    out = pl.pallas_call(
        _gaussian_logprob_kernel,
        out_shape=jax.ShapeDtypeStruct((B, 1), jnp.float32),
        grid=grid,
        in_specs=[
            pl.BlockSpec(memory_space=pltpu.MemorySpace.SMEM),   # const (1,)
            pl.BlockSpec((1, D), lambda i: (0, 0)),              # mean
            pl.BlockSpec((1, D), lambda i: (0, 0)),              # inv_std
            pl.BlockSpec((tb, D), lambda i: (i, 0)),             # z tile
        ],
        # (tb, 1) output stores are lane-sparse; acceptable since the output is
        # a small fraction of traffic relative to the z read for this kernel.
        out_specs=pl.BlockSpec((tb, 1), lambda i: (i, 0)),
        compiler_params=pltpu.CompilerParams(
            dimension_semantics=("parallel",),
        ),
    )(const, mean2, inv_std2, z)
    return out[:, 0]


class GaussianPriorJax:
    """JAX mirror of the PyTorch GaussianPrior module.

    forward() in PyTorch returns a Distribution object; here the object itself
    exposes the distribution's tensor-level hot paths (log_prob / sample).
    """

    def __init__(self, latent_dim):
        self.latent_dim = latent_dim
        # Deterministic, non-trainable params, exactly as in the PyTorch __init__.
        self.mean = jnp.zeros((latent_dim,), dtype=jnp.float32)
        self.std = jnp.ones((latent_dim,), dtype=jnp.float32)

    def forward(self):
        return self

    __call__ = forward

    def log_prob(self, z):
        return gaussian_prior_log_prob(z, self.mean, self.std)

    def sample(self, key, sample_shape=()):
        # Reparameterized sample: mean + std * eps  (pure-JAX glue).
        eps = jax.random.normal(
            key, tuple(sample_shape) + (self.latent_dim,), dtype=jnp.float32
        )
        return self.mean + self.std * eps


def _reference_log_prob(z, mean, std):
    return jnp.sum(
        -0.5 * ((z - mean) / std) ** 2
        - jnp.log(std)
        - 0.5 * math.log(2.0 * math.pi),
        axis=-1,
    )


if __name__ == "__main__":
    latent_dim = 32
    prior = GaussianPriorJax(latent_dim).forward()
    key = jax.random.PRNGKey(0)

    # Case 1: small batch, single grid step.
    k1, k2 = jax.random.split(key)
    z1 = jax.random.normal(k1, (8, latent_dim), dtype=jnp.float32)
    lp1 = jax.block_until_ready(prior.log_prob(z1))
    ref1 = _reference_log_prob(z1, prior.mean, prior.std)
    assert lp1.shape == (8,)
    assert jnp.allclose(lp1, ref1, atol=1e-5, rtol=1e-5)

    # Case 2: multi-tile grid with a partial tail tile (B=20, 8-row tiles),
    # exercising the batch grid + OOB-row masking on the last block.
    z2 = jax.random.normal(k2, (20, latent_dim), dtype=jnp.float32)
    lp2 = jax.block_until_ready(
        gaussian_prior_log_prob(z2, prior.mean, prior.std, block_rows=8)
    )
    ref2 = _reference_log_prob(z2, prior.mean, prior.std)
    assert lp2.shape == (20,)
    assert jnp.allclose(lp2, ref2, atol=1e-5, rtol=1e-5)

    print("KERNEL_OK")
</pallas_src>

<mosaic_0001>
module attributes {stable_mosaic.version = 11 : i64} {
  func.func @_gaussian_logprob_kernel(%arg0: i32, %arg1: memref<1xf32, #tpu.memory_space<smem>>, %arg2: memref<1x32xf32, #tpu.memory_space<vmem>>, %arg3: memref<1x32xf32, #tpu.memory_space<vmem>>, %arg4: memref<8x32xf32, #tpu.memory_space<vmem>>, %arg5: memref<8x1xf32, #tpu.memory_space<vmem>>) attributes {dimension_semantics = [#tpu.dimension_semantics<parallel>], iteration_bounds = array<i64: 1>, scalar_prefetch = 0 : i64, scratch_operands = 0 : i64, tpu.core_type = #tpu.core_type<tc>, window_params = [{transform_indices = @transform_0, window_bounds = array<i64: 1>}, {pipeline_mode = #tpu.pipeline_mode<synchronous>, transform_indices = @transform_1, window_bounds = array<i64: 1, 32>}, {pipeline_mode = #tpu.pipeline_mode<synchronous>, transform_indices = @transform_2, window_bounds = array<i64: 1, 32>}, {transform_indices = @transform_3, window_bounds = array<i64: 8, 32>}, {transform_indices = @transform_4, window_bounds = array<i64: 8, 1>}]} {
    %c0 = arith.constant 0 : index
    %c0_0 = arith.constant 0 : index
    %0 = vector.load %arg4[%c0, %c0_0] : memref<8x32xf32, #tpu.memory_space<vmem>>, vector<8x32xf32>
    %c0_1 = arith.constant 0 : index
    %c0_2 = arith.constant 0 : index
    %1 = vector.load %arg2[%c0_1, %c0_2] : memref<1x32xf32, #tpu.memory_space<vmem>>, vector<1x32xf32>
    %2 = vector.broadcast %1 : vector<1x32xf32> to vector<8x32xf32>
    %3 = arith.subf %0, %2 : vector<8x32xf32>
    %c0_3 = arith.constant 0 : index
    %c0_4 = arith.constant 0 : index
    %4 = vector.load %arg3[%c0_3, %c0_4] : memref<1x32xf32, #tpu.memory_space<vmem>>, vector<1x32xf32>
    %5 = vector.broadcast %4 : vector<1x32xf32> to vector<8x32xf32>
    %6 = arith.mulf %3, %5 : vector<8x32xf32>
    %7 = arith.mulf %6, %6 : vector<8x32xf32>
    %cst = arith.constant -5.000000e-01 : f32
    %8 = vector.broadcast %cst : f32 to vector<8x32xf32>
    %9 = arith.mulf %8, %7 : vector<8x32xf32>
    %cst_5 = arith.constant dense<0.000000e+00> : vector<8xf32>
    %10 = vector.multi_reduction <add>, %9, %cst_5 [1] : vector<8x32xf32> to vector<8xf32>
    %11 = vector.shape_cast %10 : vector<8xf32> to vector<8x1xf32>
    %c0_6 = arith.constant 0 : index
    %12 = memref.load %arg1[%c0_6] : memref<1xf32, #tpu.memory_space<smem>>
    %13 = vector.broadcast %12 : f32 to vector<8x1xf32>
    %14 = arith.addf %11, %13 : vector<8x1xf32>
    %c0_7 = arith.constant 0 : index
    %c0_8 = arith.constant 0 : index
    %15 = vector.load %arg5[%c0_7, %c0_8] : memref<8x1xf32, #tpu.memory_space<vmem>>, vector<8x1xf32>
    tpu.vector_store %arg5[%c0_7, %c0_8], %14 {strides = array<i32>} : memref<8x1xf32, #tpu.memory_space<vmem>>, vector<8x1xf32>,
    return
  }
  func.func @transform_0(%arg0: i32) -> i32 {
    %c0_i32 = arith.constant 0 : i32
    %c0_i32_0 = arith.constant 0 : i32
    return %c0_i32 : i32
  }
  func.func @transform_1(%arg0: i32) -> (i32, i32) {
    %c0_i32 = arith.constant 0 : i32
    %c0_i32_0 = arith.constant 0 : i32
    %c0_i32_1 = arith.constant 0 : i32
    return %c0_i32, %c0_i32_0 : i32, i32
  }
  func.func @transform_2(%arg0: i32) -> (i32, i32) {
    %c0_i32 = arith.constant 0 : i32
    %c0_i32_0 = arith.constant 0 : i32
    %c0_i32_1 = arith.constant 0 : i32
    return %c0_i32, %c0_i32_0 : i32, i32
  }
  func.func @transform_3(%arg0: i32) -> (i32, i32) {
    %c0_i32 = arith.constant 0 : i32
    %c0_i32_0 = arith.constant 0 : i32
    return %arg0, %c0_i32 : i32, i32
  }
  func.func @transform_4(%arg0: i32) -> (i32, i32) {
    %c0_i32 = arith.constant 0 : i32
    %c0_i32_0 = arith.constant 0 : i32
    return %arg0, %c0_i32 : i32, i32
  }
}

</mosaic_0001>

<llo_original>
// kernel: tpu_custom_call.1
$region0: #{tpu_custom_call.1}
  #allocation0 [shape = 'u32[]', space=smem, size = 0x4, offset = 0x4, fixed_abs, tag = 'smem constant byte address 0x4 - core index']
  #allocation1 [shape = 'u32[72,128]{1,0:T(1,128)}', space=vmem, size = 0x9000, scoped, tag = 'internal scratch']
  #allocation2 [shape = 'f32[1]{0:T(128)S(6)}', space=smem, size = 0x200, scoped, tag = 'scoped memory for tpu_custom_call.1']
  %s0 = inlined_call_operand.<no memory space> [shape: f32[1], index: 0, kind: input, shape index: {}]
  %s1 = inlined_call_operand.vmem [shape: f32[1,32], index: 1, kind: input, shape index: {}]
  %s2 = inlined_call_operand.vmem [shape: f32[1,32], index: 2, kind: input, shape index: {}]
  %s3 = inlined_call_operand.hbm [shape: f32[8,32], index: 3, kind: input, shape index: {}]
  %s4 = inlined_call_operand.vmem [shape: f32[8,1], index: 4, kind: output, shape index: {}]
  %s5 = sld [smem:[#allocation0]]
  $region30: #{tpu_custom_call.1} parent=0
    _
  %s7 = ssub.s32 1, %s5
  %s8 = scalar_select 0, %s7, %s5
  %9 = sst [smem:[#allocation2]] %s0
  $region1: #{tpu_custom_call.1} parent=0
    #allocation3 [shape = 'u8[4096]{0}', space=vmem, size = 0x1000, scoped, tag = 'input window, operand 3, single buffered']
    #allocation4 [shape = 's32[1]{0}', space=sflag, size = 0x4, scoped, tag = 'scoped memory for tpu_custom_call.1']
    %10 = vsyncpa [#allocation4], 0
    // Predicated region
    $region2: #{tpu_custom_call.1} parent=1 // pred_check
      _
    $region3: #{tpu_custom_call.1} parent=1 // pred_check_branch
      %12 = sbr.rel (0) target = $region5
    $region4: #{tpu_custom_call.1} parent=1 // pred_region
      _
    $region5: #{tpu_custom_call.1} parent=1 // pred_fallthru
      _
    // Predicated region
    $region6: #{tpu_custom_call.1} parent=1 // pred_check
      _
    $region7: #{tpu_custom_call.1} parent=1 // pred_check_branch
      %14 = sbr.rel (0) target = $region9
    $region8: #{tpu_custom_call.1} parent=1 // pred_region
      _
    $region9: #{tpu_custom_call.1} parent=1 // pred_fallthru
      _
    // Predicated region
    $region10: #{tpu_custom_call.1} parent=1 // pred_check
      _
    $region11: #{tpu_custom_call.1} parent=1 // pred_check_branch
      %16 = sbr.rel (0) target = $region13
    $region12: #{tpu_custom_call.1} parent=1 // pred_region
      _
    $region13: #{tpu_custom_call.1} parent=1 // pred_fallthru
      _
    // Predicated region
    $region14: #{tpu_custom_call.1} parent=1 // pred_check
      _
    $region15: #{tpu_custom_call.1} parent=1 // pred_check_branch
      %18 = sbr.rel (0) target = $region17
    $region16: #{tpu_custom_call.1} parent=1 // pred_region
      %20 = vsyncadd [#allocation4], 0
      %s22 = sshll.u32 %s3, 4
      %s23 = int_to_ptr.hbm [resolvable:$true] %s22
      %s24 = sshll.u32 [#allocation3], 4
      %s25 = int_to_ptr.vmem [resolvable:$true] %s24
      %27 = dma.hbm_to_vmem [thread:$0]  %s23, 128, %s25, [#allocation4]
    $region17: #{tpu_custom_call.1} parent=1 // pred_fallthru
      _
    // Predicated region
    $region18: #{tpu_custom_call.1} parent=1 // pred_check
      _
    $region19: #{tpu_custom_call.1} parent=1 // pred_check_branch
      %29 = sbr.rel (0) target = $region21
    $region20: #{tpu_custom_call.1} parent=1 // pred_region
      %31 = dma.done [#allocation4], 128
    $region21: #{tpu_custom_call.1} parent=1 // pred_fallthru
      _
    %v32 = vld [vmem:[#allocation3] sm:$0xff]
    %v33 = vld [vmem:[%s1] sm:$0x1]
    %v35 = vperm.slane %v33, 0
    %v37 = vsub.f32 %v32, %v35
    %v38 = vld [vmem:[%s2] sm:$0x1]
    %v40 = vperm.slane %v38, 0
    %v42 = vmul.f32 %v37, %v40
    %v43 = vmul.f32 %v42, %v42
    %v44 = vmul.f32 %v43, -0.5
    %vm45 = vcmask 261120
    %v46 = vsel %vm45, %v44, 0.0
    %47 = vadd.xlane.f32.xlu0 %v46
    %v48 = vpop.xlane.xlu0 %47
    %s49 = sld [smem:[#allocation2]]
    %v50 = vstv %s49
    %v51 = vadd.f32 %v48, %v50
    %vm52 = vcmask 7168
    %53 = vst.msk [vmem:[%s4] sm:$0xff] %vm52, %v51
    // Predicated region
    $region22: #{tpu_custom_call.1} parent=1 // pred_check
      _
    $region23: #{tpu_custom_call.1} parent=1 // pred_check_branch
      %55 = sbr.rel (0) target = $region25
    $region24: #{tpu_custom_call.1} parent=1 // pred_region
      _
    $region25: #{tpu_custom_call.1} parent=1 // pred_fallthru
      _
    // Predicated region
    $region26: #{tpu_custom_call.1} parent=1 // pred_check
      _
    $region27: #{tpu_custom_call.1} parent=1 // pred_check_branch
      %57 = sbr.rel (0) target = $region29
    $region28: #{tpu_custom_call.1} parent=1 // pred_region
      _
    $region29: #{tpu_custom_call.1} parent=1 // pred_fallthru
      _
    %58 = vsyncpa [#allocation4], 1

</llo_original>
